<compile_context>
chip_gen: v5e
topology: v5e:2x2
jax: 0.10.0
libtpu: 0.0.40
codegen_flags: <defaults>
</compile_context>

<pallas_src>
import functools

import jax
import jax.numpy as jnp
from jax.experimental import pallas as pl
from jax.experimental.pallas import tpu as pltpu

PATCH_SIZE = 5
STRIDE = 1
WEIGHT_SPATIAL = 0.1
BANDWIDTH = 1.0

# lanes per CC chunk (bf16: 25 * 32768 * 2B ~ 1.6 MB per input buffer;
# 2 inputs x 2 pipeline buffers ~ 6.6 MB -> fits v5e/v6e/v7x comfortably).
_CC_CHUNK_TARGET = 32768


def _round_up(v, m):
    return ((v + m - 1) // m) * m


# ----------------------------- JAX glue (matches torch semantics exactly) ----

def _extract_image_patches(x, patch_size, stride):
    # torch: x.unfold(2,ps,st).unfold(3,ps,st).reshape(B,C,-1,ps,ps).permute(0,1,3,4,2)
    b, c, h, w = x.shape
    nh = (h - patch_size) // stride + 1
    nw = (w - patch_size) // stride + 1
    idx_h = (jnp.arange(nh) * stride)[:, None] + jnp.arange(patch_size)[None, :]
    idx_w = (jnp.arange(nw) * stride)[:, None] + jnp.arange(patch_size)[None, :]
    ih = idx_h[:, None, :, None]  # (nh, 1, ps, 1)
    iw = idx_w[None, :, None, :]  # (1, nw, 1, ps)
    patches = x[:, :, ih, iw]  # (B, C, nh, nw, ps, ps)
    patches = patches.reshape(b, c, nh * nw, patch_size, patch_size)
    patches = jnp.transpose(patches, (0, 1, 3, 4, 2))  # (B, C, ps, ps, nP)
    return patches


def _compute_meshgrid(shape):
    b, _, h, w = shape
    rows = jnp.arange(h, dtype=jnp.float32) / (h + 1)
    cols = jnp.arange(w, dtype=jnp.float32) / (w + 1)
    rr, cc = jnp.meshgrid(rows, cols, indexing="ij")
    grid = jnp.stack([rr, cc])[None]  # (1, 2, h, w)
    return jnp.tile(grid, (b, 1, 1, 1))  # (B, 2, h, w)


def _compute_mse_distance(x, y):
    b, c, h, w = x.shape
    xv = x.reshape(b, c, -1)
    yv = y.reshape(b, c, -1)
    xs = jnp.sum(xv ** 2, axis=1)  # (B, HW)
    ys = jnp.sum(yv ** 2, axis=1)  # (B, HW)
    a = jnp.einsum("bci,bcj->bij", yv, xv)  # (B, HW, HW)
    dist = ys[:, :, None] - 2.0 * a + xs[:, None, :]
    dist = jnp.transpose(dist, (0, 2, 1)).reshape(b, h * w, h * w)
    return jnp.maximum(dist, 0.0)


def _compute_relative_distance(distance):
    dmin = jnp.min(distance, axis=2, keepdims=True)
    return distance / (dmin + 1e-5)


def _compute_contextual(relative_distance, bandwidth):
    return jax.nn.softmax((1.0 - relative_distance) / bandwidth, axis=2)


# ----------------------------------- Pallas kernel ---------------------------

def _cobi_kernel(x_ref, y_ref, cs_ref, out_ref, acc_ref, xsq_ref, ysq_ref, *,
                 weight_spatial, bandwidth, hw):
    k = pl.program_id(1)

    @pl.when(k == 0)
    def _():
        acc_ref[...] = jnp.zeros_like(acc_ref)
        xsq_ref[...] = jnp.zeros_like(xsq_ref)
        ysq_ref[...] = jnp.zeros_like(ysq_ref)

    x = x_ref[0]  # (HW, CCk) bf16, channels lane-dense
    y = y_ref[0]  # (HW, CCk) bf16

    # Raw (unnormalized) inner products on the MXU, contracting the channel
    # (lane) axis of both operands; accumulate in f32 across CC chunks.
    acc_ref[...] += jax.lax.dot_general(
        x, y, dimension_numbers=(((1,), (1,)), ((), ())),
        preferred_element_type=jnp.float32)

    # Per-row squared norms accumulated in f32 (zero padding of CC is inert).
    xf = x.astype(jnp.float32)
    yf = y.astype(jnp.float32)
    xsq_ref[...] += jnp.sum(xf * xf, axis=1, keepdims=True)
    ysq_ref[...] += jnp.sum(yf * yf, axis=1, keepdims=True)

    @pl.when(k == pl.num_programs(1) - 1)
    def _():
        # cosine[i,j] = <x_i, y_j> / (max(||x_i||,1e-12) * max(||y_j||,1e-12))
        # == F.normalize(x,dim=channel) . F.normalize(y,dim=channel)
        xnorm = jnp.maximum(jnp.sqrt(xsq_ref[...]), 1e-12)      # (HW, 1)
        ynorm = jnp.maximum(jnp.sqrt(ysq_ref[...]), 1e-12)      # (HW, 1)
        # Move ynorm from a sublane column to a lane row (tiny, no transpose):
        rows = jax.lax.broadcasted_iota(jnp.int32, (hw, hw), 0)
        cols = jax.lax.broadcasted_iota(jnp.int32, (hw, hw), 1)
        ynorm_row = jnp.sum(jnp.where(rows == cols, ynorm, 0.0),
                            axis=0, keepdims=True)              # (1, HW)
        cosine = acc_ref[...] / (xnorm * ynorm_row)

        dist = 1.0 - cosine
        dmin = jnp.min(dist, axis=1, keepdims=True)
        rel = dist / (dmin + 1e-5)
        logits = (1.0 - rel) / bandwidth
        m = jnp.max(logits, axis=1, keepdims=True)
        e = jnp.exp(logits - m)
        ctx_feat = e / jnp.sum(e, axis=1, keepdims=True)

        cx = (1.0 - weight_spatial) * ctx_feat + weight_spatial * cs_ref[0]
        k_max = jnp.max(cx, axis=1, keepdims=True)                   # (HW, 1)
        cx_mean = jnp.sum(k_max, axis=0, keepdims=True) / float(hw)  # (1, 1)
        out_ref[0] = -jnp.log(cx_mean + 1e-5)


def contextual_bilateral_loss_pallas(sr, gt,
                                     weight_spatial=WEIGHT_SPATIAL,
                                     bandwidth=BANDWIDTH,
                                     patch_size=PATCH_SIZE,
                                     stride=STRIDE,
                                     cc_chunk=None):
    # --- rgb path: fold image patches into the channel dimension (NCHW) ---
    sr_p = _extract_image_patches(sr, patch_size, stride)
    gt_p = _extract_image_patches(gt, patch_size, stride)
    b = sr.shape[0]
    _, _, hp, wp, _ = sr_p.shape
    sr_t = sr_p.reshape(b, -1, hp, wp)  # (B, C*nP, ps, ps)
    gt_t = gt_p.reshape(b, -1, hp, wp)

    bsz, cc, h, w = sr_t.shape
    hw = h * w

    # spatial contextual term is identical for every batch element -> once.
    grid_feat = _compute_meshgrid((1, cc, h, w))
    d_sp = _compute_mse_distance(grid_feat, grid_feat)
    ctx_spatial = _compute_contextual(
        _compute_relative_distance(d_sp), bandwidth).astype(jnp.float32)  # (1,HW,HW)

    # center both features with the GT mean; lane-dense (B, HW, CC) in bf16.
    y_mean = jnp.mean(gt_t, axis=(0, 2, 3), keepdims=True)
    x_c = jnp.transpose((sr_t - y_mean).reshape(bsz, cc, hw), (0, 2, 1))
    y_c = jnp.transpose((gt_t - y_mean).reshape(bsz, cc, hw), (0, 2, 1))
    x_c = x_c.astype(jnp.bfloat16)
    y_c = y_c.astype(jnp.bfloat16)

    # chunk the CC contraction axis; zero-pad (no effect on dot / norms).
    if cc_chunk is None:
        cc_chunk = min(_CC_CHUNK_TARGET, _round_up(cc, 128))
    cc_chunk = max(128, _round_up(int(cc_chunk), 128))
    cc_pad = _round_up(cc, cc_chunk)
    if cc_pad != cc:
        pad = ((0, 0), (0, 0), (0, cc_pad - cc))
        x_c = jnp.pad(x_c, pad)
        y_c = jnp.pad(y_c, pad)
    n_k = cc_pad // cc_chunk

    kernel = functools.partial(
        _cobi_kernel,
        weight_spatial=float(weight_spatial),
        bandwidth=float(bandwidth),
        hw=hw,
    )

    cost = pl.CostEstimate(
        flops=int(2 * bsz * hw * hw * cc_pad + 8 * bsz * hw * hw),
        transcendentals=int(bsz * (hw * hw + 2 * hw + 1)),
        bytes_accessed=int(bsz * 2 * hw * cc_pad * 2 + hw * hw * 4 + bsz * 4),
    )

    per_batch = pl.pallas_call(
        kernel,
        out_shape=jax.ShapeDtypeStruct((bsz, 1, 1), jnp.float32),
        grid_spec=pltpu.PrefetchScalarGridSpec(
            num_scalar_prefetch=0,
            grid=(bsz, n_k),
            in_specs=[
                pl.BlockSpec((1, hw, cc_chunk), lambda i, k: (i, 0, k)),
                pl.BlockSpec((1, hw, cc_chunk), lambda i, k: (i, 0, k)),
                pl.BlockSpec((1, hw, hw), lambda i, k: (0, 0, 0)),
            ],
            out_specs=pl.BlockSpec((1, 1, 1), lambda i, k: (i, 0, 0)),
            scratch_shapes=[
                pltpu.VMEM((hw, hw), jnp.float32),  # raw x@y^T accumulator
                pltpu.VMEM((hw, 1), jnp.float32),   # sum(x^2) per row
                pltpu.VMEM((hw, 1), jnp.float32),   # sum(y^2) per row
            ],
        ),
        compiler_params=pltpu.CompilerParams(
            dimension_semantics=("parallel", "arbitrary"),
            vmem_limit_bytes=32 * 1024 * 1024,
        ),
        cost_estimate=cost,
    )(x_c, y_c, ctx_spatial)

    loss = jnp.mean(per_batch)         # mean over batch of -log(cx + 1e-5)
    return jnp.reshape(loss, (1, 1))   # matches torch.Tensor([losses]) -> (1, 1)


# ------------------------- pure-JAX reference (for verification) -------------

def _reference_loss(sr, gt, weight_spatial, bandwidth, patch_size, stride):
    sr_p = _extract_image_patches(sr, patch_size, stride)
    gt_p = _extract_image_patches(gt, patch_size, stride)
    b = sr.shape[0]
    _, _, hp, wp, _ = sr_p.shape
    x = sr_p.reshape(b, -1, hp, wp)
    y = gt_p.reshape(b, -1, hp, wp)

    grid = _compute_meshgrid(x.shape)
    d = _compute_mse_distance(grid, grid)
    ctx_sp = _compute_contextual(_compute_relative_distance(d), bandwidth)

    y_mean = jnp.mean(y, axis=(0, 2, 3), keepdims=True)
    xc = x - y_mean
    yc = y - y_mean
    xn = xc / jnp.maximum(jnp.sqrt(jnp.sum(xc * xc, axis=1, keepdims=True)), 1e-12)
    yn = yc / jnp.maximum(jnp.sqrt(jnp.sum(yc * yc, axis=1, keepdims=True)), 1e-12)
    bsz, cc = x.shape[0], x.shape[1]
    xn = xn.reshape(bsz, cc, -1)
    yn = yn.reshape(bsz, cc, -1)
    cos = jnp.einsum("bci,bcj->bij", xn, yn)
    dist = 1.0 - cos
    ctx_feat = _compute_contextual(_compute_relative_distance(dist), bandwidth)

    cx = (1.0 - weight_spatial) * ctx_feat + weight_spatial * ctx_sp
    kmax = jnp.max(cx, axis=2, keepdims=True)
    cxm = jnp.mean(kmax, axis=1)
    return jnp.mean(-jnp.log(cxm + 1e-5))


if __name__ == "__main__":
    key = jax.random.PRNGKey(0)
    k1, k2 = jax.random.split(key)
    # small NCHW inputs consistent with the module's rgb path
    sr = jax.random.uniform(k1, (2, 3, 16, 16), dtype=jnp.float32)
    gt = jax.random.uniform(k2, (2, 3, 16, 16), dtype=jnp.float32)

    ref = jax.block_until_ready(
        _reference_loss(sr, gt, WEIGHT_SPATIAL, BANDWIDTH, PATCH_SIZE, STRIDE))

    # default chunking (single CC chunk at this size)
    out = jax.block_until_ready(contextual_bilateral_loss_pallas(sr, gt))
    assert out.shape == (1, 1), out.shape
    assert jnp.allclose(out[0, 0], ref, rtol=1e-2, atol=1e-2), (out, ref)

    # force the multi-chunk accumulation path (CC=432 -> padded 512, 4 chunks)
    out2 = jax.block_until_ready(
        contextual_bilateral_loss_pallas(sr, gt, cc_chunk=128))
    assert jnp.allclose(out2[0, 0], ref, rtol=1e-2, atol=1e-2), (out2, ref)

    print("KERNEL_OK")
</pallas_src>

<mosaic_0001>
module attributes {stable_mosaic.version = 11 : i64} {
  func.func @_cobi_kernel(%arg0: i32, %arg1: i32, %arg2: memref<1x25x512xbf16, #tpu.memory_space<vmem>>, %arg3: memref<1x25x512xbf16, #tpu.memory_space<vmem>>, %arg4: memref<1x25x25xf32, #tpu.memory_space<vmem>>, %arg5: memref<1x1x1xf32, #tpu.memory_space<vmem>>, %arg6: memref<25x25xf32, #tpu.memory_space<vmem>>, %arg7: memref<25x1xf32, #tpu.memory_space<vmem>>, %arg8: memref<25x1xf32, #tpu.memory_space<vmem>>) attributes {dimension_semantics = [#tpu.dimension_semantics<parallel>, #tpu.dimension_semantics<arbitrary>], iteration_bounds = array<i64: 2, 1>, scalar_prefetch = 0 : i64, scratch_operands = 3 : i64, tpu.core_type = #tpu.core_type<tc>, window_params = [{transform_indices = @transform_0, window_bounds = array<i64: 1, 25, 512>}, {transform_indices = @transform_1, window_bounds = array<i64: 1, 25, 512>}, {pipeline_mode = #tpu.pipeline_mode<synchronous>, transform_indices = @transform_2, window_bounds = array<i64: 1, 25, 25>}, {transform_indices = @transform_3, window_bounds = array<i64: 1, 1, 1>}]} {
    %c0_i32 = arith.constant 0 : i32
    %0 = arith.cmpi eq, %arg1, %c0_i32 : i32
    %1 = arith.extui %0 : i1 to i32
    %c0_i32_0 = arith.constant 0 : i32
    %2 = arith.cmpi ne, %1, %c0_i32_0 : i32
    scf.if %2 {
      %cst_22 = arith.constant 0.000000e+00 : f32
      %28 = vector.broadcast %cst_22 : f32 to vector<25x25xf32>
      %c0_23 = arith.constant 0 : index
      %c0_24 = arith.constant 0 : index
      %29 = vector.load %arg6[%c0_23, %c0_24] : memref<25x25xf32, #tpu.memory_space<vmem>>, vector<25x25xf32>
      tpu.vector_store %arg6[%c0_23, %c0_24], %28 {strides = array<i32>} : memref<25x25xf32, #tpu.memory_space<vmem>>, vector<25x25xf32>,
      %cst_25 = arith.constant 0.000000e+00 : f32
      %30 = vector.broadcast %cst_25 : f32 to vector<25x1xf32>
      %c0_26 = arith.constant 0 : index
      %c0_27 = arith.constant 0 : index
      %31 = vector.load %arg7[%c0_26, %c0_27] : memref<25x1xf32, #tpu.memory_space<vmem>>, vector<25x1xf32>
      tpu.vector_store %arg7[%c0_26, %c0_27], %30 {strides = array<i32>} : memref<25x1xf32, #tpu.memory_space<vmem>>, vector<25x1xf32>,
      %cst_28 = arith.constant 0.000000e+00 : f32
      %32 = vector.broadcast %cst_28 : f32 to vector<25x1xf32>
      %c0_29 = arith.constant 0 : index
      %c0_30 = arith.constant 0 : index
      %33 = vector.load %arg8[%c0_29, %c0_30] : memref<25x1xf32, #tpu.memory_space<vmem>>, vector<25x1xf32>
      tpu.vector_store %arg8[%c0_29, %c0_30], %32 {strides = array<i32>} : memref<25x1xf32, #tpu.memory_space<vmem>>, vector<25x1xf32>,
    } else {
    }
    %c0 = arith.constant 0 : index
    %c0_1 = arith.constant 0 : index
    %c0_2 = arith.constant 0 : index
    %3 = vector.load %arg2[%c0, %c0_1, %c0_2] : memref<1x25x512xbf16, #tpu.memory_space<vmem>>, vector<1x25x512xbf16>
    %4 = vector.shape_cast %3 : vector<1x25x512xbf16> to vector<25x512xbf16>
    %c0_3 = arith.constant 0 : index
    %c0_4 = arith.constant 0 : index
    %c0_5 = arith.constant 0 : index
    %5 = vector.load %arg3[%c0_3, %c0_4, %c0_5] : memref<1x25x512xbf16, #tpu.memory_space<vmem>>, vector<1x25x512xbf16>
    %6 = vector.shape_cast %5 : vector<1x25x512xbf16> to vector<25x512xbf16>
    %c0_6 = arith.constant 0 : index
    %c0_7 = arith.constant 0 : index
    %7 = vector.load %arg6[%c0_6, %c0_7] : memref<25x25xf32, #tpu.memory_space<vmem>>, vector<25x25xf32>
    %cst = arith.constant dense<0.000000e+00> : vector<25x25xf32>
    %8 = tpu.matmul %4, %6, %cst {dimension_numbers = #tpu.dot_dimension_numbers<[1], [1], [0], [0], [0, 0, 1, 0], [], []>} : vector<25x512xbf16>, vector<25x512xbf16>, vector<25x25xf32> -> vector<25x25xf32>
    %9 = arith.addf %7, %8 : vector<25x25xf32>
    %c0_8 = arith.constant 0 : index
    %c0_9 = arith.constant 0 : index
    %10 = vector.load %arg6[%c0_8, %c0_9] : memref<25x25xf32, #tpu.memory_space<vmem>>, vector<25x25xf32>
    tpu.vector_store %arg6[%c0_8, %c0_9], %9 {strides = array<i32>} : memref<25x25xf32, #tpu.memory_space<vmem>>, vector<25x25xf32>,
    %11 = arith.extf %4 : vector<25x512xbf16> to vector<25x512xf32>
    %12 = arith.extf %6 : vector<25x512xbf16> to vector<25x512xf32>
    %c0_10 = arith.constant 0 : index
    %c0_11 = arith.constant 0 : index
    %13 = vector.load %arg7[%c0_10, %c0_11] : memref<25x1xf32, #tpu.memory_space<vmem>>, vector<25x1xf32>
    %14 = arith.mulf %11, %11 : vector<25x512xf32>
    %cst_12 = arith.constant dense<0.000000e+00> : vector<25xf32>
    %15 = vector.multi_reduction <add>, %14, %cst_12 [1] : vector<25x512xf32> to vector<25xf32>
    %16 = vector.shape_cast %15 : vector<25xf32> to vector<25x1xf32>
    %17 = arith.addf %13, %16 : vector<25x1xf32>
    %c0_13 = arith.constant 0 : index
    %c0_14 = arith.constant 0 : index
    %18 = vector.load %arg7[%c0_13, %c0_14] : memref<25x1xf32, #tpu.memory_space<vmem>>, vector<25x1xf32>
    tpu.vector_store %arg7[%c0_13, %c0_14], %17 {strides = array<i32>} : memref<25x1xf32, #tpu.memory_space<vmem>>, vector<25x1xf32>,
    %c0_15 = arith.constant 0 : index
    %c0_16 = arith.constant 0 : index
    %19 = vector.load %arg8[%c0_15, %c0_16] : memref<25x1xf32, #tpu.memory_space<vmem>>, vector<25x1xf32>
    %20 = arith.mulf %12, %12 : vector<25x512xf32>
    %cst_17 = arith.constant dense<0.000000e+00> : vector<25xf32>
    %21 = vector.multi_reduction <add>, %20, %cst_17 [1] : vector<25x512xf32> to vector<25xf32>
    %22 = vector.shape_cast %21 : vector<25xf32> to vector<25x1xf32>
    %23 = arith.addf %19, %22 : vector<25x1xf32>
    %c0_18 = arith.constant 0 : index
    %c0_19 = arith.constant 0 : index
    %24 = vector.load %arg8[%c0_18, %c0_19] : memref<25x1xf32, #tpu.memory_space<vmem>>, vector<25x1xf32>
    tpu.vector_store %arg8[%c0_18, %c0_19], %23 {strides = array<i32>} : memref<25x1xf32, #tpu.memory_space<vmem>>, vector<25x1xf32>,
    %c0_i32_20 = arith.constant 0 : i32
    %25 = arith.cmpi eq, %arg1, %c0_i32_20 : i32
    %26 = arith.extui %25 : i1 to i32
    %c0_i32_21 = arith.constant 0 : i32
    %27 = arith.cmpi ne, %26, %c0_i32_21 : i32
    scf.if %27 {
      %c0_22 = arith.constant 0 : index
      %c0_23 = arith.constant 0 : index
      %28 = vector.load %arg7[%c0_22, %c0_23] : memref<25x1xf32, #tpu.memory_space<vmem>>, vector<25x1xf32>
      %29 = math.sqrt %28 : vector<25x1xf32>
      %cst_24 = arith.constant 9.99999996E-13 : f32
      %30 = vector.broadcast %cst_24 : f32 to vector<25x1xf32>
      %31 = arith.maximumf %29, %30 : vector<25x1xf32>
      %c0_25 = arith.constant 0 : index
      %c0_26 = arith.constant 0 : index
      %32 = vector.load %arg8[%c0_25, %c0_26] : memref<25x1xf32, #tpu.memory_space<vmem>>, vector<25x1xf32>
      %33 = math.sqrt %32 : vector<25x1xf32>
      %cst_27 = arith.constant 9.99999996E-13 : f32
      %34 = vector.broadcast %cst_27 : f32 to vector<25x1xf32>
      %35 = arith.maximumf %33, %34 : vector<25x1xf32>
      %36 = tpu.iota {dimensions = array<i32: 0>} : vector<25x25xi32>
      %37 = tpu.iota {dimensions = array<i32: 1>} : vector<25x25xi32>
      %38 = arith.cmpi eq, %36, %37 : vector<25x25xi32>
      %cst_28 = arith.constant 0.000000e+00 : f32
      %39 = vector.shape_cast %35 : vector<25x1xf32> to vector<25x1xf32>
      %40 = vector.broadcast %39 : vector<25x1xf32> to vector<25x25xf32>
      %41 = vector.broadcast %cst_28 : f32 to vector<25x25xf32>
      %42 = arith.select %38, %40, %41 : vector<25x25xi1>, vector<25x25xf32>
      %cst_29 = arith.constant dense<0.000000e+00> : vector<25xf32>
      %43 = vector.multi_reduction <add>, %42, %cst_29 [0] : vector<25x25xf32> to vector<25xf32>
      %44 = vector.shape_cast %43 : vector<25xf32> to vector<1x25xf32>
      %c0_30 = arith.constant 0 : index
      %c0_31 = arith.constant 0 : index
      %45 = vector.load %arg6[%c0_30, %c0_31] : memref<25x25xf32, #tpu.memory_space<vmem>>, vector<25x25xf32>
      %46 = vector.broadcast %31 : vector<25x1xf32> to vector<25x25xf32>
      %47 = vector.broadcast %44 : vector<1x25xf32> to vector<25x25xf32>
      %48 = arith.mulf %46, %47 : vector<25x25xf32>
      %49 = arith.divf %45, %48 : vector<25x25xf32>
      %cst_32 = arith.constant 1.000000e+00 : f32
      %50 = vector.broadcast %cst_32 : f32 to vector<25x25xf32>
      %51 = arith.subf %50, %49 : vector<25x25xf32>
      %cst_33 = arith.constant dense<0x7F800000> : vector<25xf32>
      %52 = vector.multi_reduction <minimumf>, %51, %cst_33 [1] : vector<25x25xf32> to vector<25xf32>
      %53 = vector.shape_cast %52 : vector<25xf32> to vector<25x1xf32>
      %cst_34 = arith.constant 9.99999974E-6 : f32
      %54 = vector.broadcast %cst_34 : f32 to vector<25x1xf32>
      %55 = arith.addf %53, %54 : vector<25x1xf32>
      %56 = vector.broadcast %55 : vector<25x1xf32> to vector<25x25xf32>
      %57 = arith.divf %51, %56 : vector<25x25xf32>
      %cst_35 = arith.constant 1.000000e+00 : f32
      %58 = vector.broadcast %cst_35 : f32 to vector<25x25xf32>
      %59 = arith.subf %58, %57 : vector<25x25xf32>
      %cst_36 = arith.constant 1.000000e+00 : f32
      %60 = vector.broadcast %cst_36 : f32 to vector<25x25xf32>
      %61 = arith.divf %59, %60 : vector<25x25xf32>
      %cst_37 = arith.constant dense<0xFF800000> : vector<25xf32>
      %62 = vector.multi_reduction <maximumf>, %61, %cst_37 [1] : vector<25x25xf32> to vector<25xf32>
      %63 = vector.shape_cast %62 : vector<25xf32> to vector<25x1xf32>
      %64 = vector.broadcast %63 : vector<25x1xf32> to vector<25x25xf32>
      %65 = arith.subf %61, %64 : vector<25x25xf32>
      %66 = math.exp %65 : vector<25x25xf32>
      %cst_38 = arith.constant dense<0.000000e+00> : vector<25xf32>
      %67 = vector.multi_reduction <add>, %66, %cst_38 [1] : vector<25x25xf32> to vector<25xf32>
      %68 = vector.shape_cast %67 : vector<25xf32> to vector<25x1xf32>
      %69 = vector.broadcast %68 : vector<25x1xf32> to vector<25x25xf32>
      %70 = arith.divf %66, %69 : vector<25x25xf32>
      %cst_39 = arith.constant 0.899999976 : f32
      %71 = vector.broadcast %cst_39 : f32 to vector<25x25xf32>
      %72 = arith.mulf %71, %70 : vector<25x25xf32>
      %c0_40 = arith.constant 0 : index
      %c0_41 = arith.constant 0 : index
      %c0_42 = arith.constant 0 : index
      %73 = vector.load %arg4[%c0_40, %c0_41, %c0_42] : memref<1x25x25xf32, #tpu.memory_space<vmem>>, vector<1x25x25xf32>
      %74 = vector.shape_cast %73 : vector<1x25x25xf32> to vector<25x25xf32>
      %cst_43 = arith.constant 1.000000e-01 : f32
      %75 = vector.broadcast %cst_43 : f32 to vector<25x25xf32>
      %76 = arith.mulf %75, %74 : vector<25x25xf32>
      %77 = arith.addf %72, %76 : vector<25x25xf32>
      %cst_44 = arith.constant dense<0xFF800000> : vector<25xf32>
      %78 = vector.multi_reduction <maximumf>, %77, %cst_44 [1] : vector<25x25xf32> to vector<25xf32>
      %79 = vector.shape_cast %78 : vector<25xf32> to vector<25x1xf32>
      %cst_45 = arith.constant dense<0.000000e+00> : vector<1xf32>
      %80 = vector.multi_reduction <add>, %79, %cst_45 [0] : vector<25x1xf32> to vector<1xf32>
      %81 = vector.shape_cast %80 : vector<1xf32> to vector<1x1xf32>
      %cst_46 = arith.constant 2.500000e+01 : f32
      %82 = vector.broadcast %cst_46 : f32 to vector<1x1xf32>
      %83 = arith.divf %81, %82 : vector<1x1xf32>
      %cst_47 = arith.constant 9.99999974E-6 : f32
      %84 = vector.broadcast %cst_47 : f32 to vector<1x1xf32>
      %85 = arith.addf %83, %84 : vector<1x1xf32>
      %86 = math.log %85 : vector<1x1xf32>
      %cst_48 = arith.constant 0.000000e+00 : f32
      %87 = vector.broadcast %cst_48 : f32 to vector<1x1xf32>
      %88 = arith.subf %87, %86 : vector<1x1xf32>
      %c0_49 = arith.constant 0 : index
      %c0_50 = arith.constant 0 : index
      %c0_51 = arith.constant 0 : index
      %89 = vector.load %arg5[%c0_49, %c0_50, %c0_51] : memref<1x1x1xf32, #tpu.memory_space<vmem>>, vector<1x1x1xf32>
      %90 = vector.shape_cast %89 : vector<1x1x1xf32> to vector<1x1xf32>
      %91 = vector.shape_cast %88 : vector<1x1xf32> to vector<1x1x1xf32>
      tpu.vector_store %arg5[%c0_49, %c0_50, %c0_51], %91 {strides = array<i32>} : memref<1x1x1xf32, #tpu.memory_space<vmem>>, vector<1x1x1xf32>,
    } else {
    }
    return
  }
  func.func @transform_0(%arg0: i32, %arg1: i32) -> (i32, i32, i32) {
    %c0_i32 = arith.constant 0 : i32
    %c0_i32_0 = arith.constant 0 : i32
    return %arg0, %c0_i32, %arg1 : i32, i32, i32
  }
  func.func @transform_1(%arg0: i32, %arg1: i32) -> (i32, i32, i32) {
    %c0_i32 = arith.constant 0 : i32
    %c0_i32_0 = arith.constant 0 : i32
    return %arg0, %c0_i32, %arg1 : i32, i32, i32
  }
  func.func @transform_2(%arg0: i32, %arg1: i32) -> (i32, i32, i32) {
    %c0_i32 = arith.constant 0 : i32
    %c0_i32_0 = arith.constant 0 : i32
    %c0_i32_1 = arith.constant 0 : i32
    %c0_i32_2 = arith.constant 0 : i32
    return %c0_i32, %c0_i32_0, %c0_i32_1 : i32, i32, i32
  }
  func.func @transform_3(%arg0: i32, %arg1: i32) -> (i32, i32, i32) {
    %c0_i32 = arith.constant 0 : i32
    %c0_i32_0 = arith.constant 0 : i32
    %c0_i32_1 = arith.constant 0 : i32
    return %arg0, %c0_i32, %c0_i32_0 : i32, i32, i32
  }
}

</mosaic_0001>

<llo_original>
// kernel: tpu_custom_call.1
$region0: #{tpu_custom_call.1}
  #allocation0 [shape = 'u32[]', space=smem, size = 0x4, offset = 0x4, fixed_abs, tag = 'smem constant byte address 0x4 - core index']
  #allocation1 [shape = 'u32[72,128]{1,0:T(1,128)}', space=vmem, size = 0x9000, scoped, tag = 'internal scratch']
  #allocation2 [shape = 'f32[25,25]{1,0:T(8,128)}', space=vmem, size = 0x4000, scoped, tag = 'scratch operand']
  #allocation3 [shape = 'f32[25,1]{1,0:T(8,128)}', space=vmem, size = 0x4000, scoped, tag = 'scratch operand']
  #allocation4 [shape = 'f32[25,1]{1,0:T(8,128)}', space=vmem, size = 0x4000, scoped, tag = 'scratch operand']
  %s0 = inlined_call_operand.vmem [shape: bf16[2,25,512], index: 0, kind: input, shape index: {}]
  %s1 = inlined_call_operand.vmem [shape: bf16[2,25,512], index: 1, kind: input, shape index: {}]
  %s2 = inlined_call_operand.vmem [shape: f32[1,25,25], index: 2, kind: input, shape index: {}]
  %s3 = inlined_call_operand.vmem [shape: f32[2,1,1], index: 3, kind: output, shape index: {}]
  %s4 = sld [smem:[#allocation0]]
  $region53: #{tpu_custom_call.1} parent=0
    _
  %s6 = ssub.s32 1, %s4
  %s7 = scalar_select 0, %s6, %s4
  loop: start=0, step=1, limit=4
  $region2: #{tpu_custom_call.1} parent=0 // loop_pre_header
    _
  $region3: #{tpu_custom_call.1} parent=0 // loop_header
    %s9 = sphi 0, %s13
    %p10 = scmp.ge.s32.totalorder %s9, 4
    %s16 = sphi 0, %s28
    %s17 = sphi 0, %s24
    %s18 = sphi 0, %s16
    %s19 = sphi 0, %s17
    %s20 = sphi 0, %s18
    %s21 = sphi 0, %s19
    %s33 = sphi 0, %s35
    %s36 = sphi 0, %s33
    %s37 = sphi 0, %s36
    %s53 = sphi 0, %s37
    %s61 = sphi 0, %s63
    %s64 = sphi 0, %s61
    %s65 = sphi 0, %s64
    %s81 = sphi 0, %s65
    %s85 = sphi 0, %s85
    %s87 = sphi 0, %s85
    %s88 = sphi 0, %s87
    %s102 = sphi 0, %s88
    %s108 = sphi 0, %s110
    %s111 = sphi 0, %s108
    %s112 = sphi 0, %s111
    %s128 = sphi 0, %s112
  $region4: #{tpu_custom_call.1} parent=0 // loop_header_branch
    %12 = sbr.rel (%p10) target = $region8
  $region5: #{tpu_custom_call.1} parent=0 // loop_body
    %s14 = ssub.s32 %s9, 1
    %s15 = ssub.s32 %s9, 2
    %s22 = sadd.s32 1, %s17
    %p23 = scmp.ge.s32.totalorder %s22, 1
    %s24 = scalar_select %p23, 0, %s22
    %s25 = sadd.s32 1, %s16
    %s26 = scalar_select %p23, %s25, %s16
    %p27 = scmp.ge.s32.totalorder %s26, 2
    %s28 = scalar_select %p27, 0, %s26
    %s29 = ssub.s32 %s16, %s28
    %s30 = ssub.s32 %s17, %s24
    %s31 = sor.u32 %s29, %s30
    %p32 = scmp.eq.s32.totalorder %s31, 0
    %s34 = sadd.s32 %s33, 1
    %s35 = scalar_select %p32, %s33, %s34
    %p38 = pneg %p32
    %p39 = scmp.eq.s32.totalorder %s9, 1
    %p40 = por %p38, %p39
    %p41 = scmp.ne.s32.totalorder %s33, %s36
    %p42 = scmp.eq.s32.totalorder %s9, 0
    %p43 = por %p41, %p42
    %p44 = scmp.ne.s32.totalorder %s33, %s36
    %p45 = scmp.eq.s32.totalorder %s14, 1
    %p46 = por %p44, %p45
    %p47 = scmp.ne.s32.totalorder %s36, %s37
    %p48 = scmp.eq.s32.totalorder %s14, 0
    %p49 = por %p47, %p48
    %p50 = scmp.ne.s32.totalorder %s36, %s37
    %p51 = scmp.eq.s32.totalorder %s15, 1
    %p52 = por %p50, %p51
    %p54 = scmp.ne.s32.totalorder %s37, %s53
    %p55 = scmp.eq.s32.totalorder %s15, 0
    %p56 = por %p54, %p55
    %s57 = ssub.s32 %s16, %s28
    %s58 = ssub.s32 %s17, %s24
    %s59 = sor.u32 %s57, %s58
    %p60 = scmp.eq.s32.totalorder %s59, 0
    %s62 = sadd.s32 %s61, 1
    %s63 = scalar_select %p60, %s61, %s62
    %p66 = pneg %p60
    %p67 = scmp.eq.s32.totalorder %s9, 1
    %p68 = por %p66, %p67
    %p69 = scmp.ne.s32.totalorder %s61, %s64
    %p70 = scmp.eq.s32.totalorder %s9, 0
    %p71 = por %p69, %p70
    %p72 = scmp.ne.s32.totalorder %s61, %s64
    %p73 = scmp.eq.s32.totalorder %s14, 1
    %p74 = por %p72, %p73
    %p75 = scmp.ne.s32.totalorder %s64, %s65
    %p76 = scmp.eq.s32.totalorder %s14, 0
    %p77 = por %p75, %p76
    %p78 = scmp.ne.s32.totalorder %s64, %s65
    %p79 = scmp.eq.s32.totalorder %s15, 1
    %p80 = por %p78, %p79
    %p82 = scmp.ne.s32.totalorder %s65, %s81
    %p83 = scmp.eq.s32.totalorder %s15, 0
    %p84 = por %p82, %p83
    %s86 = sadd.s32 %s85, 1
    %p89 = scmp.eq.s32.totalorder %s9, 1
    %p90 = scmp.ne.s32.totalorder %s85, %s87
    %p91 = scmp.eq.s32.totalorder %s9, 0
    %p92 = por %p90, %p91
    %p93 = scmp.ne.s32.totalorder %s85, %s87
    %p94 = scmp.eq.s32.totalorder %s14, 1
    %p95 = por %p93, %p94
    %p96 = scmp.ne.s32.totalorder %s87, %s88
    %p97 = scmp.eq.s32.totalorder %s14, 0
    %p98 = por %p96, %p97
    %p99 = scmp.ne.s32.totalorder %s87, %s88
    %p100 = scmp.eq.s32.totalorder %s15, 1
    %p101 = por %p99, %p100
    %p103 = scmp.ne.s32.totalorder %s88, %s102
    %p104 = scmp.eq.s32.totalorder %s15, 0
    %p105 = por %p103, %p104
    %s106 = ssub.s32 %s16, %s28
    %p107 = scmp.eq.s32.totalorder %s106, 0
    %s109 = sadd.s32 %s108, 1
    %s110 = scalar_select %p107, %s108, %s109
    %p113 = pneg %p107
    %p114 = scmp.eq.s32.totalorder %s9, 1
    %p115 = por %p113, %p114
    %p116 = scmp.ne.s32.totalorder %s108, %s111
    %p117 = scmp.eq.s32.totalorder %s9, 0
    %p118 = por %p116, %p117
    %p119 = scmp.ne.s32.totalorder %s108, %s111
    %p120 = scmp.eq.s32.totalorder %s14, 1
    %p121 = por %p119, %p120
    %p122 = scmp.ne.s32.totalorder %s111, %s112
    %p123 = scmp.eq.s32.totalorder %s14, 0
    %p124 = por %p122, %p123
    %p125 = scmp.ne.s32.totalorder %s111, %s112
    %p126 = scmp.eq.s32.totalorder %s15, 1
    %p127 = por %p125, %p126
    %p129 = scmp.ne.s32.totalorder %s112, %s128
    %p130 = scmp.eq.s32.totalorder %s15, 0
    %p131 = por %p129, %p130
    %p132 = scmp.le.s32.totalorder 1, %s9
    %p133 = scmp.lt.s32.totalorder %s9, 3
    %p134 = pnand %p132, %p133
    %p135 = pneg %p134
    // Predicated region
    $region9: #{tpu_custom_call.1} parent=5 // pred_check
      _
    $region10: #{tpu_custom_call.1} parent=5 // pred_check_branch
      %137 = sbr.rel (%p134) target = $region12
    $region11: #{tpu_custom_call.1} parent=5 // pred_region
      %s138 = ssub.s32 %s9, 1
      // Predicated region
      $region13: #{tpu_custom_call.1} parent=11 // pred_check
        %p139 = pneg %p98
      $region14: #{tpu_custom_call.1} parent=11 // pred_check_branch
        %141 = sbr.rel (%p139) target = $region16
      $region15: #{tpu_custom_call.1} parent=11 // pred_region
        _
      $region16: #{tpu_custom_call.1} parent=11 // pred_fallthru
        _
    $region12: #{tpu_custom_call.1} parent=5 // pred_fallthru
      _
    %p142 = scmp.lt.s32.totalorder %s9, 2
    // Predicated region
    $region17: #{tpu_custom_call.1} parent=5 // pred_check
      %p143 = pneg %p142
    $region18: #{tpu_custom_call.1} parent=5 // pred_check_branch
      %145 = sbr.rel (%p143) target = $region20
    $region19: #{tpu_custom_call.1} parent=5 // pred_region
      // Predicated region
      $region21: #{tpu_custom_call.1} parent=19 // pred_check
        %p146 = pneg %p43
      $region22: #{tpu_custom_call.1} parent=19 // pred_check_branch
        %148 = sbr.rel (%p146) target = $region24
      $region23: #{tpu_custom_call.1} parent=19 // pred_region
        %s149 = smul.u32 4, %s17
        %p150 = scmp.lt.s32.totalorder %s16, 1
        %s151 = scalar_select %p150, %s16, 1
        %p152 = scmp.lt.s32.totalorder %s149, 3
        %s153 = scalar_select %p152, %s149, 3
        %s154 = smul.addr %s151, 16
        %s155 = sadd.s32 %s153, %s154
        %s156 = smul.addr %s155, 4
        %s157 = scalar_lea.vmem %s0, %s156
        %s158 = smul.u32 4, %s17
      $region24: #{tpu_custom_call.1} parent=19 // pred_fallthru
        _
      // Predicated region
      $region25: #{tpu_custom_call.1} parent=19 // pred_check
        %p159 = pneg %p71
      $region26: #{tpu_custom_call.1} parent=19 // pred_check_branch
        %161 = sbr.rel (%p159) target = $region28
      $region27: #{tpu_custom_call.1} parent=19 // pred_region
        %s162 = smul.u32 4, %s17
        %p163 = scmp.lt.s32.totalorder %s16, 1
        %s164 = scalar_select %p163, %s16, 1
        %p165 = scmp.lt.s32.totalorder %s162, 3
        %s166 = scalar_select %p165, %s162, 3
        %s167 = smul.addr %s164, 16
        %s168 = sadd.s32 %s166, %s167
        %s169 = smul.addr %s168, 4
        %s170 = scalar_lea.vmem %s1, %s169
        %s171 = smul.u32 4, %s17
      $region28: #{tpu_custom_call.1} parent=19 // pred_fallthru
        _
    $region20: #{tpu_custom_call.1} parent=5 // pred_fallthru
      _
    %p172 = scmp.le.s32.totalorder 1, %s9
    %p173 = scmp.lt.s32.totalorder %s9, 3
    %p174 = pnand %p172, %p173
    %p175 = pneg %p174
    // Predicated region
    $region29: #{tpu_custom_call.1} parent=5 // pred_check
      _
    $region30: #{tpu_custom_call.1} parent=5 // pred_check_branch
      %177 = sbr.rel (%p174) target = $region32
    $region31: #{tpu_custom_call.1} parent=5 // pred_region
      %s178 = ssub.s32 %s9, 1
      %s179 = smul.u32 4, %s19
      %p180 = scmp.lt.s32.totalorder %s18, 1
      %s181 = scalar_select %p180, %s18, 1
      %p182 = scmp.lt.s32.totalorder %s179, 3
      %s183 = scalar_select %p182, %s179, 3
      %s184 = smul.addr %s181, 16
      %s185 = sadd.s32 %s183, %s184
      %s186 = smul.addr %s185, 4
      %s187 = scalar_lea.vmem %s0, %s186
      %p188 = pneg %p49
      %p189 = pneg %p46
      %s190 = smul.u32 4, %s19
      %p191 = scmp.lt.s32.totalorder %s18, 1
      %s192 = scalar_select %p191, %s18, 1
      %p193 = scmp.lt.s32.totalorder %s190, 3
      %s194 = scalar_select %p193, %s190, 3
      %s195 = smul.addr %s192, 16
      %s196 = sadd.s32 %s194, %s195
      %s197 = smul.addr %s196, 4
      %s198 = scalar_lea.vmem %s1, %s197
      %p199 = pneg %p77
      %p200 = pneg %p74
      %p201 = pneg %p98
      %p202 = pneg %p95
      %p203 = pneg %p124
      %p204 = pneg %p121
      %p205 = scmp.lt.s32.totalorder %s18, 1
      %s206 = scalar_select %p205, %s18, 1
      %s207 = scalar_lea.vmem %s3, %s206
      %s208 = smul.u32 4, %s19
      %p209 = scmp.lt.s32.totalorder %s18, 1
      %s210 = scalar_select %p209, %s18, 1
      %p211 = scmp.lt.s32.totalorder %s208, 3
      %s212 = scalar_select %p211, %s208, 3
      %s213 = smul.addr %s210, 16
      %s214 = sadd.s32 %s212, %s213
      %s215 = smul.addr %s214, 4
      %s216 = scalar_lea.vmem %s0, %s215
      %s217 = smul.u32 4, %s19
      %s218 = smul.u32 4, %s19
      %p219 = scmp.lt.s32.totalorder %s18, 1
      %s220 = scalar_select %p219, %s18, 1
      %p221 = scmp.lt.s32.totalorder %s218, 3
      %s222 = scalar_select %p221, %s218, 3
      %s223 = smul.addr %s220, 16
      %s224 = sadd.s32 %s222, %s223
      %s225 = smul.addr %s224, 4
      %s226 = scalar_lea.vmem %s1, %s225
      %s227 = smul.u32 4, %s19
      %p228 = scmp.lt.s32.totalorder %s18, 1
      %s229 = scalar_select %p228, %s18, 1
      %s230 = scalar_lea.vmem %s3, %s229
      %p232 = scmp.eq.s32.totalorder %s19, 0
      // Predicated region
      $region33: #{tpu_custom_call.1} parent=31 // pred_check
        %p233 = pneg %p232
      $region34: #{tpu_custom_call.1} parent=31 // pred_check_branch
        %235 = sbr.rel (%p233) target = $region36
      $region35: #{tpu_custom_call.1} parent=31 // pred_region
        %vm236 = vcmask 203776
        %237 = vst.msk [vmem:[#allocation2] sm:$0xff] %vm236, 0.0
        %238 = vst.msk [vmem:[#allocation2 + $0x8] sm:$0xff] %vm236, 0.0
        %239 = vst.msk [vmem:[#allocation2 + $0x10] sm:$0xff] %vm236, 0.0
        %vm240 = vcmask 196608
        %241 = vst.msk [vmem:[#allocation2 + $0x18] sm:$0x1] %vm240, 0.0
        %vm242 = vcmask 7168
        %243 = vst.msk [vmem:[#allocation3] sm:$0xff] %vm242, 0.0
        %244 = vst.msk [vmem:[#allocation3 + $0x8] sm:$0xff] %vm242, 0.0
        %245 = vst.msk [vmem:[#allocation3 + $0x10] sm:$0xff] %vm242, 0.0
        %vm246 = vcmask 0
        %247 = vst.msk [vmem:[#allocation3 + $0x18] sm:$0x1] %vm246, 0.0
        %248 = vst.msk [vmem:[#allocation4] sm:$0xff] %vm242, 0.0
        %249 = vst.msk [vmem:[#allocation4 + $0x8] sm:$0xff] %vm242, 0.0
        %250 = vst.msk [vmem:[#allocation4 + $0x10] sm:$0xff] %vm242, 0.0
        %251 = vst.msk [vmem:[#allocation4 + $0x18] sm:$0x1] %vm246, 0.0
      $region36: #{tpu_custom_call.1} parent=31 // pred_fallthru
        _
      %v252 = vld [vmem:[%s216] sm:$0xff]
      %v253 = vld [vmem:[%s216 + $0x8] sm:$0xff]
      %v254 = vld [vmem:[%s216 + $0x10] sm:$0xff]
      %v255 = vld [vmem:[%s216 + $0x18] sm:$0xff]
      %v256 = vld [vmem:[%s216 + $0x20] sm:$0xff]
      %v257 = vld [vmem:[%s216 + $0x28] sm:$0xff]
      %v258 = vld [vmem:[%s216 + $0x30] sm:$0x11]
      %v259 = vld [vmem:[%s216 + $0x38] sm:$0x11]
      %v260 = vld [vmem:[%s226] sm:$0xff]
      %v261 = vld [vmem:[%s226 + $0x8] sm:$0xff]
      %v262 = vld [vmem:[%s226 + $0x10] sm:$0xff]
      %v263 = vld [vmem:[%s226 + $0x18] sm:$0xff]
      %v264 = vld [vmem:[%s226 + $0x20] sm:$0xff]
      %v265 = vld [vmem:[%s226 + $0x28] sm:$0xff]
      %v266 = vld [vmem:[%s226 + $0x30] sm:$0x11]
      %v267 = vld [vmem:[%s226 + $0x38] sm:$0x11]
      %v268 = vld [vmem:[#allocation2] sm:$0xff]
      %v269 = vld [vmem:[#allocation2 + $0x8] sm:$0xff]
      %v270 = vld [vmem:[#allocation2 + $0x10] sm:$0xff]
      %v271 = vld [vmem:[#allocation2 + $0x18] sm:$0x1]
      %v280 = vunpack.c.l.b16 %v252
      %v281 = vunpack.c.h.b16 %v252
      %v282 = vunpack.c.l.b16 %v253
      %v283 = vunpack.c.h.b16 %v253
      %v284 = vunpack.c.l.b16 %v254
      %v285 = vunpack.c.h.b16 %v254
      %v286 = vunpack.c.l.b16 %v255
      %v287 = vunpack.c.h.b16 %v255
      %v288 = vunpack.c.l.b16 %v256
      %v289 = vunpack.c.h.b16 %v256
      %v290 = vunpack.c.l.b16 %v257
      %v291 = vunpack.c.h.b16 %v257
      %v292 = vunpack.c.l.b16 %v258
      %v293 = vunpack.c.h.b16 %v258
      %v294 = vunpack.c.l.b16 %v259
      %v295 = vunpack.c.h.b16 %v259
      %v296 = vpack.c.b16 %v284, %v280
      %v297 = vpack.c.b16 %v285, %v281
      %v298 = vpack.c.b16 %v286, %v282
      %v299 = vpack.c.b16 %v287, %v283
      %v300 = vpack.c.b16 %v292, %v288
      %v301 = vpack.c.b16 %v293, %v289
      %v302 = vpack.c.b16 %v294, %v290
      %v303 = vpack.c.b16 %v295, %v291
      %v320 = vunpack.c.l.b16 %v260
      %v321 = vunpack.c.h.b16 %v260
      %v322 = vunpack.c.l.b16 %v261
      %v323 = vunpack.c.h.b16 %v261
      %v324 = vunpack.c.l.b16 %v262
      %v325 = vunpack.c.h.b16 %v262
      %v326 = vunpack.c.l.b16 %v263
      %v327 = vunpack.c.h.b16 %v263
      %v328 = vunpack.c.l.b16 %v264
      %v329 = vunpack.c.h.b16 %v264
      %v330 = vunpack.c.l.b16 %v265
      %v331 = vunpack.c.h.b16 %v265
      %v332 = vunpack.c.l.b16 %v266
      %v333 = vunpack.c.h.b16 %v266
      %v334 = vunpack.c.l.b16 %v267
      %v335 = vunpack.c.h.b16 %v267
      %v336 = vpack.c.b16 %v324, %v320
      %v337 = vpack.c.b16 %v325, %v321
      %v338 = vpack.c.b16 %v326, %v322
      %v339 = vpack.c.b16 %v327, %v323
      %v340 = vpack.c.b16 %v332, %v328
      %v341 = vpack.c.b16 %v333, %v329
      %v342 = vpack.c.b16 %v334, %v330
      %v343 = vpack.c.b16 %v335, %v331
      %352 = vmatpush.bf16.xpose.msra.mxu0 0
      %353 = vmatpush.bf16.xpose.msra.mxu0 0
      %354 = vmatpush.bf16.xpose.msra.mxu0 0
      %355 = vmatpush.bf16.xpose.msra.mxu0 0
      %356 = vmatpush.bf16.xpose.msra.mxu0 0
      %357 = vmatpush.bf16.xpose.msra.mxu0 0
      %358 = vmatpush.bf16.xpose.msra.mxu0 %v340
      %359 = vmatpush.bf16.xpose.msra.mxu0 %v336
      %360 = vmatmul.bf16.gmra.mxu0 %v296
      %v361 = vpop.f32.mrf.mxu0
      %v362 = vadd.f32 0.0, %v361
      %v363 = vpop.f32.mrf.mxu0
      %v364 = vadd.f32 0.0, %v363
      %365 = vmatmul.bf16.gmra.mxu0 %v300
      %v366 = vpop.f32.mrf.mxu0
      %v367 = vadd.f32 0.0, %v366
      %v368 = vpop.f32.mrf.mxu0
      %v369 = vadd.f32 0.0, %v368
      %370 = vdwg.mxu0
      %371 = vmatpush.bf16.xpose.msra.mxu0 0
      %372 = vmatpush.bf16.xpose.msra.mxu0 0
      %373 = vmatpush.bf16.xpose.msra.mxu0 0
      %374 = vmatpush.bf16.xpose.msra.mxu0 0
      %375 = vmatpush.bf16.xpose.msra.mxu0 0
      %376 = vmatpush.bf16.xpose.msra.mxu0 0
      %377 = vmatpush.bf16.xpose.msra.mxu0 %v341
      %378 = vmatpush.bf16.xpose.msra.mxu0 %v337
      %379 = vmatmul.bf16.gmra.mxu0 %v297
      %v380 = vpop.f32.mrf.mxu0
      %v381 = vadd.f32 %v362, %v380
      %v382 = vpop.f32.mrf.mxu0
      %v383 = vadd.f32 %v364, %v382
      %384 = vmatmul.bf16.gmra.mxu0 %v301
      %v385 = vpop.f32.mrf.mxu0
      %v386 = vadd.f32 %v367, %v385
      %v387 = vpop.f32.mrf.mxu0
      %v388 = vadd.f32 %v369, %v387
      %389 = vdwg.mxu0
      %390 = vmatpush.bf16.xpose.msra.mxu0 0
      %391 = vmatpush.bf16.xpose.msra.mxu0 0
      %392 = vmatpush.bf16.xpose.msra.mxu0 0
      %393 = vmatpush.bf16.xpose.msra.mxu0 0
      %394 = vmatpush.bf16.xpose.msra.mxu0 0
      %395 = vmatpush.bf16.xpose.msra.mxu0 0
      %396 = vmatpush.bf16.xpose.msra.mxu0 %v342
      %397 = vmatpush.bf16.xpose.msra.mxu0 %v338
      %398 = vmatmul.bf16.gmra.mxu0 %v298
      %v399 = vpop.f32.mrf.mxu0
      %v400 = vadd.f32 %v381, %v399
      %v401 = vpop.f32.mrf.mxu0
      %v402 = vadd.f32 %v383, %v401
      %403 = vmatmul.bf16.gmra.mxu0 %v302
      %v404 = vpop.f32.mrf.mxu0
      %v405 = vadd.f32 %v386, %v404
      %v406 = vpop.f32.mrf.mxu0
      %v407 = vadd.f32 %v388, %v406
      %408 = vdwg.mxu0
      %409 = vmatpush.bf16.xpose.msra.mxu0 0
      %410 = vmatpush.bf16.xpose.msra.mxu0 0
      %411 = vmatpush.bf16.xpose.msra.mxu0 0
      %412 = vmatpush.bf16.xpose.msra.mxu0 0
      %413 = vmatpush.bf16.xpose.msra.mxu0 0
      %414 = vmatpush.bf16.xpose.msra.mxu0 0
      %415 = vmatpush.bf16.xpose.msra.mxu0 %v343
      %416 = vmatpush.bf16.xpose.msra.mxu0 %v339
      %417 = vmatmul.bf16.gmra.mxu0 %v299
      %v418 = vpop.f32.mrf.mxu0
      %v419 = vadd.f32 %v400, %v418
      %v420 = vpop.f32.mrf.mxu0
      %v421 = vadd.f32 %v402, %v420
      %422 = vmatmul.bf16.gmra.mxu0 %v303
      %v423 = vpop.f32.mrf.mxu0
      %v424 = vadd.f32 %v405, %v423
      %v425 = vpop.f32.mrf.mxu0
      %v426 = vadd.f32 %v407, %v425
      %427 = vdwg.mxu0
      %v428 = vadd.f32 %v268, %v419
      %v429 = vadd.f32 %v269, %v421
      %v430 = vadd.f32 %v270, %v424
      %v431 = vadd.f32 %v271, %v426
      %vm432 = vcmask 203776
      %433 = vst.msk [vmem:[#allocation2] sm:$0xff] %vm432, %v428
      %434 = vst.msk [vmem:[#allocation2 + $0x8] sm:$0xff] %vm432, %v429
      %435 = vst.msk [vmem:[#allocation2 + $0x10] sm:$0xff] %vm432, %v430
      %vm436 = vcmask 196608
      %437 = vst.msk [vmem:[#allocation2 + $0x18] sm:$0x1] %vm436, %v431
      %v438 = vunpack.c.l.bf16 %v252
      %v439 = vunpack.c.h.bf16 %v252
      %v440 = vunpack.c.l.bf16 %v253
      %v441 = vunpack.c.h.bf16 %v253
      %v442 = vunpack.c.l.bf16 %v254
      %v443 = vunpack.c.h.bf16 %v254
      %v444 = vunpack.c.l.bf16 %v255
      %v445 = vunpack.c.h.bf16 %v255
      %v446 = vunpack.c.l.bf16 %v256
      %v447 = vunpack.c.h.bf16 %v256
      %v448 = vunpack.c.l.bf16 %v257
      %v449 = vunpack.c.h.bf16 %v257
      %v450 = vunpack.c.l.bf16 %v258
      %v451 = vunpack.c.h.bf16 %v258
      %v452 = vunpack.c.l.bf16 %v259
      %v453 = vunpack.c.h.bf16 %v259
      %v454 = vunpack.c.l.bf16 %v260
      %v455 = vunpack.c.h.bf16 %v260
      %v456 = vunpack.c.l.bf16 %v261
      %v457 = vunpack.c.h.bf16 %v261
      %v458 = vunpack.c.l.bf16 %v262
      %v459 = vunpack.c.h.bf16 %v262
      %v460 = vunpack.c.l.bf16 %v263
      %v461 = vunpack.c.h.bf16 %v263
      %v462 = vunpack.c.l.bf16 %v264
      %v463 = vunpack.c.h.bf16 %v264
      %v464 = vunpack.c.l.bf16 %v265
      %v465 = vunpack.c.h.bf16 %v265
      %v466 = vunpack.c.l.bf16 %v266
      %v467 = vunpack.c.h.bf16 %v266
      %v468 = vunpack.c.l.bf16 %v267
      %v469 = vunpack.c.h.bf16 %v267
      %v470 = vld [vmem:[#allocation3] sm:$0xff]
      %v471 = vld [vmem:[#allocation3 + $0x8] sm:$0xff]
      %v472 = vld [vmem:[#allocation3 + $0x10] sm:$0xff]
      %v473 = vld [vmem:[#allocation3 + $0x18] sm:$0x1]
      %v474 = vmul.f32 %v438, %v438
      %v475 = vmul.f32 %v439, %v439
      %v476 = vmul.f32 %v440, %v440
      %v477 = vmul.f32 %v441, %v441
      %v478 = vmul.f32 %v442, %v442
      %v479 = vmul.f32 %v443, %v443
      %v480 = vmul.f32 %v444, %v444
      %v481 = vmul.f32 %v445, %v445
      %v482 = vmul.f32 %v446, %v446
      %v483 = vmul.f32 %v447, %v447
      %v484 = vmul.f32 %v448, %v448
      %v485 = vmul.f32 %v449, %v449
      %v486 = vmul.f32 %v450, %v450
      %v487 = vmul.f32 %v451, %v451
      %v488 = vmul.f32 %v452, %v452
      %v489 = vmul.f32 %v453, %v453
      %v490 = vadd.f32 %v474, %v475
      %v491 = vadd.f32 %v490, %v476
      %v492 = vadd.f32 %v491, %v477
      %493 = vadd.xlane.f32.xlu0 %v492
      %v494 = vpop.xlane.xlu0 %493
      %v495 = vadd.f32 %v478, %v479
      %v496 = vadd.f32 %v495, %v480
      %v497 = vadd.f32 %v496, %v481
      %498 = vadd.xlane.f32.xlu0 %v497
      %v499 = vpop.xlane.xlu0 %498
      %v500 = vadd.f32 %v482, %v483
      %v501 = vadd.f32 %v500, %v484
      %v502 = vadd.f32 %v501, %v485
      %503 = vadd.xlane.f32.xlu0 %v502
      %v504 = vpop.xlane.xlu0 %503
      %vm505 = vcmask 1040384
      %v506 = vsel %vm505, %v486, 0.0
      %v507 = vsel %vm505, %v487, 0.0
      %v508 = vadd.f32 %v506, %v507
      %v509 = vsel %vm505, %v488, 0.0
      %v510 = vadd.f32 %v508, %v509
      %v511 = vsel %vm505, %v489, 0.0
      %v512 = vadd.f32 %v510, %v511
      %513 = vadd.xlane.f32.xlu0 %v512
      %v514 = vpop.xlane.xlu0 %513
      %v515 = vadd.f32 %v470, %v494
      %v516 = vadd.f32 %v471, %v499
      %v517 = vadd.f32 %v472, %v504
      %v518 = vadd.f32 %v473, %v514
      %vm519 = vcmask 7168
      %520 = vst.msk [vmem:[#allocation3] sm:$0xff] %vm519, %v515
      %521 = vst.msk [vmem:[#allocation3 + $0x8] sm:$0xff] %vm519, %v516
      %522 = vst.msk [vmem:[#allocation3 + $0x10] sm:$0xff] %vm519, %v517
      %vm523 = vcmask 0
      %524 = vst.msk [vmem:[#allocation3 + $0x18] sm:$0x1] %vm523, %v518
      %v525 = vld [vmem:[#allocation4] sm:$0xff]
      %v526 = vld [vmem:[#allocation4 + $0x8] sm:$0xff]
      %v527 = vld [vmem:[#allocation4 + $0x10] sm:$0xff]
      %v528 = vld [vmem:[#allocation4 + $0x18] sm:$0x1]
      %v529 = vmul.f32 %v454, %v454
      %v530 = vmul.f32 %v455, %v455
      %v531 = vmul.f32 %v456, %v456
      %v532 = vmul.f32 %v457, %v457
      %v533 = vmul.f32 %v458, %v458
      %v534 = vmul.f32 %v459, %v459
      %v535 = vmul.f32 %v460, %v460
      %v536 = vmul.f32 %v461, %v461
      %v537 = vmul.f32 %v462, %v462
      %v538 = vmul.f32 %v463, %v463
      %v539 = vmul.f32 %v464, %v464
      %v540 = vmul.f32 %v465, %v465
      %v541 = vmul.f32 %v466, %v466
      %v542 = vmul.f32 %v467, %v467
      %v543 = vmul.f32 %v468, %v468
      %v544 = vmul.f32 %v469, %v469
      %v545 = vadd.f32 %v529, %v530
      %v546 = vadd.f32 %v545, %v531
      %v547 = vadd.f32 %v546, %v532
      %548 = vadd.xlane.f32.xlu0 %v547
      %v549 = vpop.xlane.xlu0 %548
      %v550 = vadd.f32 %v533, %v534
      %v551 = vadd.f32 %v550, %v535
      %v552 = vadd.f32 %v551, %v536
      %553 = vadd.xlane.f32.xlu0 %v552
      %v554 = vpop.xlane.xlu0 %553
      %v555 = vadd.f32 %v537, %v538
      %v556 = vadd.f32 %v555, %v539
      %v557 = vadd.f32 %v556, %v540
      %558 = vadd.xlane.f32.xlu0 %v557
      %v559 = vpop.xlane.xlu0 %558
      %v560 = vsel %vm505, %v541, 0.0
      %v561 = vsel %vm505, %v542, 0.0
      %v562 = vadd.f32 %v560, %v561
      %v563 = vsel %vm505, %v543, 0.0
      %v564 = vadd.f32 %v562, %v563
      %v565 = vsel %vm505, %v544, 0.0
      %v566 = vadd.f32 %v564, %v565
      %567 = vadd.xlane.f32.xlu0 %v566
      %v568 = vpop.xlane.xlu0 %567
      %v569 = vadd.f32 %v525, %v549
      %v570 = vadd.f32 %v526, %v554
      %v571 = vadd.f32 %v527, %v559
      %v572 = vadd.f32 %v528, %v568
      %573 = vst.msk [vmem:[#allocation4] sm:$0xff] %vm519, %v569
      %574 = vst.msk [vmem:[#allocation4 + $0x8] sm:$0xff] %vm519, %v570
      %575 = vst.msk [vmem:[#allocation4 + $0x10] sm:$0xff] %vm519, %v571
      %576 = vst.msk [vmem:[#allocation4 + $0x18] sm:$0x1] %vm523, %v572
      // Predicated region
      $region37: #{tpu_custom_call.1} parent=31 // pred_check
        %p577 = pneg %p232
      $region38: #{tpu_custom_call.1} parent=31 // pred_check_branch
        %579 = sbr.rel (%p577) target = $region40
      $region39: #{tpu_custom_call.1} parent=31 // pred_region
        %v580 = vld [vmem:[#allocation3] sm:$0xff]
        %v581 = vld [vmem:[#allocation3 + $0x8] sm:$0xff]
        %v582 = vld [vmem:[#allocation3 + $0x10] sm:$0xff]
        %v583 = vld [vmem:[#allocation3 + $0x18] sm:$0x1]
        %v584 = vrsqrt.pop %v580
        %v585 = vmul.f32 %v584, %v580
        %v586 = vmul.f32 %v585, %v584
        %v587 = vmul.f32 0.5, %v586
        %v588 = vsub.f32 1.5, %v587
        %v589 = vmul.f32 %v584, %v588
        %v590 = vmul.f32 %v580, %v589
        %vm591 = vcmp.eq.f32.partialorder %v580, inf
        %v592 = vsel %vm591, %v580, %v590
        %vm593 = vcmp.eq.f32.partialorder %v580, 0.0
        %v594 = vand.u32 %v580, 2147483648
        %v595 = vsel %vm593, %v594, %v592
        %v596 = vrsqrt.pop %v581
        %v597 = vmul.f32 %v596, %v581
        %v598 = vmul.f32 %v597, %v596
        %v599 = vmul.f32 0.5, %v598
        %v600 = vsub.f32 1.5, %v599
        %v601 = vmul.f32 %v596, %v600
        %v602 = vmul.f32 %v581, %v601
        %vm603 = vcmp.eq.f32.partialorder %v581, inf
        %v604 = vsel %vm603, %v581, %v602
        %vm605 = vcmp.eq.f32.partialorder %v581, 0.0
        %v606 = vand.u32 %v581, 2147483648
        %v607 = vsel %vm605, %v606, %v604
        %v608 = vrsqrt.pop %v582
        %v609 = vmul.f32 %v608, %v582
        %v610 = vmul.f32 %v609, %v608
        %v611 = vmul.f32 0.5, %v610
        %v612 = vsub.f32 1.5, %v611
        %v613 = vmul.f32 %v608, %v612
        %v614 = vmul.f32 %v582, %v613
        %vm615 = vcmp.eq.f32.partialorder %v582, inf
        %v616 = vsel %vm615, %v582, %v614
        %vm617 = vcmp.eq.f32.partialorder %v582, 0.0
        %v618 = vand.u32 %v582, 2147483648
        %v619 = vsel %vm617, %v618, %v616
        %v620 = vrsqrt.pop %v583
        %v621 = vmul.f32 %v620, %v583
        %v622 = vmul.f32 %v621, %v620
        %v623 = vmul.f32 0.5, %v622
        %v624 = vsub.f32 1.5, %v623
        %v625 = vmul.f32 %v620, %v624
        %v626 = vmul.f32 %v583, %v625
        %vm627 = vcmp.eq.f32.partialorder %v583, inf
        %v628 = vsel %vm627, %v583, %v626
        %vm629 = vcmp.eq.f32.partialorder %v583, 0.0
        %v630 = vand.u32 %v583, 2147483648
        %v631 = vsel %vm629, %v630, %v628
        %v632 = vmax.f32 %v595, 1e-12
        %v633 = vmax.f32 %v607, 1e-12
        %v634 = vmax.f32 %v619, 1e-12
        %v635 = vmax.f32 %v631, 1e-12
        %v636 = vld [vmem:[#allocation4] sm:$0xff]
        %v637 = vld [vmem:[#allocation4 + $0x8] sm:$0xff]
        %v638 = vld [vmem:[#allocation4 + $0x10] sm:$0xff]
        %v639 = vld [vmem:[#allocation4 + $0x18] sm:$0x1]
        %v640 = vrsqrt.pop %v636
        %v641 = vmul.f32 %v640, %v636
        %v642 = vmul.f32 %v641, %v640
        %v643 = vmul.f32 0.5, %v642
        %v644 = vsub.f32 1.5, %v643
        %v645 = vmul.f32 %v640, %v644
        %v646 = vmul.f32 %v636, %v645
        %vm647 = vcmp.eq.f32.partialorder %v636, inf
        %v648 = vsel %vm647, %v636, %v646
        %vm649 = vcmp.eq.f32.partialorder %v636, 0.0
        %v650 = vand.u32 %v636, 2147483648
        %v651 = vsel %vm649, %v650, %v648
        %v652 = vrsqrt.pop %v637
        %v653 = vmul.f32 %v652, %v637
        %v654 = vmul.f32 %v653, %v652
        %v655 = vmul.f32 0.5, %v654
        %v656 = vsub.f32 1.5, %v655
        %v657 = vmul.f32 %v652, %v656
        %v658 = vmul.f32 %v637, %v657
        %vm659 = vcmp.eq.f32.partialorder %v637, inf
        %v660 = vsel %vm659, %v637, %v658
        %vm661 = vcmp.eq.f32.partialorder %v637, 0.0
        %v662 = vand.u32 %v637, 2147483648
        %v663 = vsel %vm661, %v662, %v660
        %v664 = vrsqrt.pop %v638
        %v665 = vmul.f32 %v664, %v638
        %v666 = vmul.f32 %v665, %v664
        %v667 = vmul.f32 0.5, %v666
        %v668 = vsub.f32 1.5, %v667
        %v669 = vmul.f32 %v664, %v668
        %v670 = vmul.f32 %v638, %v669
        %vm671 = vcmp.eq.f32.partialorder %v638, inf
        %v672 = vsel %vm671, %v638, %v670
        %vm673 = vcmp.eq.f32.partialorder %v638, 0.0
        %v674 = vand.u32 %v638, 2147483648
        %v675 = vsel %vm673, %v674, %v672
        %v676 = vrsqrt.pop %v639
        %v677 = vmul.f32 %v676, %v639
        %v678 = vmul.f32 %v677, %v676
        %v679 = vmul.f32 0.5, %v678
        %v680 = vsub.f32 1.5, %v679
        %v681 = vmul.f32 %v676, %v680
        %v682 = vmul.f32 %v639, %v681
        %vm683 = vcmp.eq.f32.partialorder %v639, inf
        %v684 = vsel %vm683, %v639, %v682
        %vm685 = vcmp.eq.f32.partialorder %v639, 0.0
        %v686 = vand.u32 %v639, 2147483648
        %v687 = vsel %vm685, %v686, %v684
        %v688 = vmax.f32 %v651, 1e-12
        %v689 = vmax.f32 %v663, 1e-12
        %v690 = vmax.f32 %v675, 1e-12
        %v691 = vmax.f32 %v687, 1e-12
        %v692 = vlaneseq
        %v693 = vshrl.u32 %v692, 7
        %v694 = vadd.s32 %v693, 8
        %v695 = vadd.s32 %v693, 16
        %v696 = vadd.s32 %v693, 24
        %v697 = vlaneseq
        %v698 = vand.u32 %v697, 127
        %vm699 = vcmp.eq.s32.totalorder %v693, %v698
        %vm700 = vcmp.eq.s32.totalorder %v694, %v698
        %vm701 = vcmp.eq.s32.totalorder %v695, %v698
        %vm702 = vcmp.eq.s32.totalorder %v696, %v698
        %704 = vset.pattern.permute.xlu0 0
        %705 = vperm.xlu0 %704, %v688
        %v706 = vpop.permute.xlu0 %705
        %709 = vset.pattern.permute.xlu0 0
        %710 = vperm.xlu0 %709, %v689
        %v711 = vpop.permute.xlu0 %710
        %714 = vset.pattern.permute.xlu0 0
        %715 = vperm.xlu0 %714, %v690
        %v716 = vpop.permute.xlu0 %715
        %719 = vset.pattern.permute.xlu0 0
        %720 = vperm.xlu0 %719, %v691
        %v721 = vpop.permute.xlu0 %720
        %v723 = vsel %vm699, %v706, 0.0
        %v724 = vsel %vm700, %v711, 0.0
        %v725 = vsel %vm701, %v716, 0.0
        %v726 = vsel %vm702, %v721, 0.0
        %v727 = vsel %vm432, %v723, 0.0
        %v728 = vsel %vm432, %v724, 0.0
        %v729 = vadd.f32 %v727, %v728
        %v730 = vsel %vm432, %v725, 0.0
        %v731 = vadd.f32 %v729, %v730
        %v732 = vsel %vm436, %v726, 0.0
        %v733 = vadd.f32 %v731, %v732
        %v734 = vrot.slane %v733, 4
        %v735 = vadd.f32 %v733, %v734
        %v736 = vrot.slane %v735, 2
        %v737 = vadd.f32 %v735, %v736
        %v738 = vrot.slane %v737, 1
        %v739 = vadd.f32 %v737, %v738
        %v740 = vld [vmem:[#allocation2] sm:$0xff]
        %v741 = vld [vmem:[#allocation2 + $0x8] sm:$0xff]
        %v742 = vld [vmem:[#allocation2 + $0x10] sm:$0xff]
        %v743 = vld [vmem:[#allocation2 + $0x18] sm:$0x1]
        %745 = vset.pattern.permute.xlu0 0
        %746 = vperm.xlu0 %745, %v632
        %v747 = vpop.permute.xlu0 %746
        %750 = vset.pattern.permute.xlu0 0
        %751 = vperm.xlu0 %750, %v633
        %v752 = vpop.permute.xlu0 %751
        %755 = vset.pattern.permute.xlu0 0
        %756 = vperm.xlu0 %755, %v634
        %v757 = vpop.permute.xlu0 %756
        %760 = vset.pattern.permute.xlu0 0
        %761 = vperm.xlu0 %760, %v635
        %v762 = vpop.permute.xlu0 %761
        %v764 = vmul.f32 %v747, %v739
        %v765 = vmul.f32 %v752, %v739
        %v766 = vmul.f32 %v757, %v739
        %v767 = vmul.f32 %v762, %v739
        %v768 = vrcp.pop %v764
        %v769 = vmul.f32 %v764, %v768
        %v770 = vsub.f32 1.0, %v769
        %v771 = vmul.f32 %v768, %v770
        %v772 = vadd.f32 %v768, %v771
        %vm773 = vweird.f32 %v764
        %vm774 = vweird.f32 %v768
        %vm775 = vmor %vm773, %vm774
        %v776 = vsel %vm775, %v768, %v772
        %v777 = vand.u32 2147483647, %v764
        %vm778 = vcmp.eq.f32.partialorder %v777, 8.507059e+37
        %v779 = vand.u32 %v764, 2147483648
        %v780 = vor.u32 1.1754944e-38, %v779
        %v781 = vsel %vm778, %v780, %v776
        %v782 = vmul.f32 %v740, %v781
        %v783 = vrcp.pop %v765
        %v784 = vmul.f32 %v765, %v783
        %v785 = vsub.f32 1.0, %v784
        %v786 = vmul.f32 %v783, %v785
        %v787 = vadd.f32 %v783, %v786
        %vm788 = vweird.f32 %v765
        %vm789 = vweird.f32 %v783
        %vm790 = vmor %vm788, %vm789
        %v791 = vsel %vm790, %v783, %v787
        %v792 = vand.u32 2147483647, %v765
        %vm793 = vcmp.eq.f32.partialorder %v792, 8.507059e+37
        %v794 = vand.u32 %v765, 2147483648
        %v795 = vor.u32 1.1754944e-38, %v794
        %v796 = vsel %vm793, %v795, %v791
        %v797 = vmul.f32 %v741, %v796
        %v798 = vrcp.pop %v766
        %v799 = vmul.f32 %v766, %v798
        %v800 = vsub.f32 1.0, %v799
        %v801 = vmul.f32 %v798, %v800
        %v802 = vadd.f32 %v798, %v801
        %vm803 = vweird.f32 %v766
        %vm804 = vweird.f32 %v798
        %vm805 = vmor %vm803, %vm804
        %v806 = vsel %vm805, %v798, %v802
        %v807 = vand.u32 2147483647, %v766
        %vm808 = vcmp.eq.f32.partialorder %v807, 8.507059e+37
        %v809 = vand.u32 %v766, 2147483648
        %v810 = vor.u32 1.1754944e-38, %v809
        %v811 = vsel %vm808, %v810, %v806
        %v812 = vmul.f32 %v742, %v811
        %v813 = vrcp.pop %v767
        %v814 = vmul.f32 %v767, %v813
        %v815 = vsub.f32 1.0, %v814
        %v816 = vmul.f32 %v813, %v815
        %v817 = vadd.f32 %v813, %v816
        %vm818 = vweird.f32 %v767
        %vm819 = vweird.f32 %v813
        %vm820 = vmor %vm818, %vm819
        %v821 = vsel %vm820, %v813, %v817
        %v822 = vand.u32 2147483647, %v767
        %vm823 = vcmp.eq.f32.partialorder %v822, 8.507059e+37
        %v824 = vand.u32 %v767, 2147483648
        %v825 = vor.u32 1.1754944e-38, %v824
        %v826 = vsel %vm823, %v825, %v821
        %v827 = vmul.f32 %v743, %v826
        %v828 = vsub.f32 1.0, %v782
        %v829 = vsub.f32 1.0, %v797
        %v830 = vsub.f32 1.0, %v812
        %v831 = vsub.f32 1.0, %v827
        %v832 = vsel %vm432, %v828, inf
        %833 = vmin.xlane.f32.xlu0 %v832
        %v834 = vpop.xlane.xlu0 %833
        %v835 = vsel %vm432, %v829, inf
        %836 = vmin.xlane.f32.xlu0 %v835
        %v837 = vpop.xlane.xlu0 %836
        %v838 = vsel %vm432, %v830, inf
        %839 = vmin.xlane.f32.xlu0 %v838
        %v840 = vpop.xlane.xlu0 %839
        %v841 = vsel %vm436, %v831, inf
        %842 = vmin.xlane.f32.xlu0 %v841
        %v843 = vpop.xlane.xlu0 %842
        %v844 = vadd.f32 %v834, 1e-05
        %v845 = vadd.f32 %v837, 1e-05
        %v846 = vadd.f32 %v840, 1e-05
        %v847 = vadd.f32 %v843, 1e-05
        %v848 = vrcp.pop %v844
        %v849 = vmul.f32 %v844, %v848
        %v850 = vsub.f32 1.0, %v849
        %v851 = vmul.f32 %v848, %v850
        %v852 = vadd.f32 %v848, %v851
        %vm853 = vweird.f32 %v844
        %vm854 = vweird.f32 %v848
        %vm855 = vmor %vm853, %vm854
        %v856 = vsel %vm855, %v848, %v852
        %v857 = vand.u32 2147483647, %v844
        %vm858 = vcmp.eq.f32.partialorder %v857, 8.507059e+37
        %v859 = vand.u32 %v844, 2147483648
        %v860 = vor.u32 1.1754944e-38, %v859
        %v861 = vsel %vm858, %v860, %v856
        %v862 = vmul.f32 %v828, %v861
        %v863 = vrcp.pop %v845
        %v864 = vmul.f32 %v845, %v863
        %v865 = vsub.f32 1.0, %v864
        %v866 = vmul.f32 %v863, %v865
        %v867 = vadd.f32 %v863, %v866
        %vm868 = vweird.f32 %v845
        %vm869 = vweird.f32 %v863
        %vm870 = vmor %vm868, %vm869
        %v871 = vsel %vm870, %v863, %v867
        %v872 = vand.u32 2147483647, %v845
        %vm873 = vcmp.eq.f32.partialorder %v872, 8.507059e+37
        %v874 = vand.u32 %v845, 2147483648
        %v875 = vor.u32 1.1754944e-38, %v874
        %v876 = vsel %vm873, %v875, %v871
        %v877 = vmul.f32 %v829, %v876
        %v878 = vrcp.pop %v846
        %v879 = vmul.f32 %v846, %v878
        %v880 = vsub.f32 1.0, %v879
        %v881 = vmul.f32 %v878, %v880
        %v882 = vadd.f32 %v878, %v881
        %vm883 = vweird.f32 %v846
        %vm884 = vweird.f32 %v878
        %vm885 = vmor %vm883, %vm884
        %v886 = vsel %vm885, %v878, %v882
        %v887 = vand.u32 2147483647, %v846
        %vm888 = vcmp.eq.f32.partialorder %v887, 8.507059e+37
        %v889 = vand.u32 %v846, 2147483648
        %v890 = vor.u32 1.1754944e-38, %v889
        %v891 = vsel %vm888, %v890, %v886
        %v892 = vmul.f32 %v830, %v891
        %v893 = vrcp.pop %v847
        %v894 = vmul.f32 %v847, %v893
        %v895 = vsub.f32 1.0, %v894
        %v896 = vmul.f32 %v893, %v895
        %v897 = vadd.f32 %v893, %v896
        %vm898 = vweird.f32 %v847
        %vm899 = vweird.f32 %v893
        %vm900 = vmor %vm898, %vm899
        %v901 = vsel %vm900, %v893, %v897
        %v902 = vand.u32 2147483647, %v847
        %vm903 = vcmp.eq.f32.partialorder %v902, 8.507059e+37
        %v904 = vand.u32 %v847, 2147483648
        %v905 = vor.u32 1.1754944e-38, %v904
        %v906 = vsel %vm903, %v905, %v901
        %v907 = vmul.f32 %v831, %v906
        %v908 = vsub.f32 1.0, %v862
        %v909 = vsub.f32 1.0, %v877
        %v910 = vsub.f32 1.0, %v892
        %v911 = vsub.f32 1.0, %v907
        %v912 = vsel %vm432, %v908, -inf
        %913 = vmax.xlane.f32.xlu0 %v912
        %v914 = vpop.xlane.xlu0 %913
        %v915 = vsel %vm432, %v909, -inf
        %916 = vmax.xlane.f32.xlu0 %v915
        %v917 = vpop.xlane.xlu0 %916
        %v918 = vsel %vm432, %v910, -inf
        %919 = vmax.xlane.f32.xlu0 %v918
        %v920 = vpop.xlane.xlu0 %919
        %v921 = vsel %vm436, %v911, -inf
        %922 = vmax.xlane.f32.xlu0 %v921
        %v923 = vpop.xlane.xlu0 %922
        %v924 = vsub.f32 %v908, %v914
        %v925 = vsub.f32 %v909, %v917
        %v926 = vsub.f32 %v910, %v920
        %v927 = vsub.f32 %v911, %v923
        %v928 = vmul.f32 %v924, 1.442695
        %v929 = vpow.pop %v928
        %v930 = vmul.f32 %v925, 1.442695
        %v931 = vpow.pop %v930
        %v932 = vmul.f32 %v926, 1.442695
        %v933 = vpow.pop %v932
        %v934 = vmul.f32 %v927, 1.442695
        %v935 = vpow.pop %v934
        %v936 = vsel %vm432, %v929, 0.0
        %937 = vadd.xlane.f32.xlu0 %v936
        %v938 = vpop.xlane.xlu0 %937
        %v939 = vsel %vm432, %v931, 0.0
        %940 = vadd.xlane.f32.xlu0 %v939
        %v941 = vpop.xlane.xlu0 %940
        %v942 = vsel %vm432, %v933, 0.0
        %943 = vadd.xlane.f32.xlu0 %v942
        %v944 = vpop.xlane.xlu0 %943
        %v945 = vsel %vm436, %v935, 0.0
        %946 = vadd.xlane.f32.xlu0 %v945
        %v947 = vpop.xlane.xlu0 %946
        %v948 = vrcp.pop %v938
        %v949 = vmul.f32 %v938, %v948
        %v950 = vsub.f32 1.0, %v949
        %v951 = vmul.f32 %v948, %v950
        %v952 = vadd.f32 %v948, %v951
        %vm953 = vweird.f32 %v938
        %vm954 = vweird.f32 %v948
        %vm955 = vmor %vm953, %vm954
        %v956 = vsel %vm955, %v948, %v952
        %v957 = vand.u32 2147483647, %v938
        %vm958 = vcmp.eq.f32.partialorder %v957, 8.507059e+37
        %v959 = vand.u32 %v938, 2147483648
        %v960 = vor.u32 1.1754944e-38, %v959
        %v961 = vsel %vm958, %v960, %v956
        %v962 = vmul.f32 %v929, %v961
        %v963 = vrcp.pop %v941
        %v964 = vmul.f32 %v941, %v963
        %v965 = vsub.f32 1.0, %v964
        %v966 = vmul.f32 %v963, %v965
        %v967 = vadd.f32 %v963, %v966
        %vm968 = vweird.f32 %v941
        %vm969 = vweird.f32 %v963
        %vm970 = vmor %vm968, %vm969
        %v971 = vsel %vm970, %v963, %v967
        %v972 = vand.u32 2147483647, %v941
        %vm973 = vcmp.eq.f32.partialorder %v972, 8.507059e+37
        %v974 = vand.u32 %v941, 2147483648
        %v975 = vor.u32 1.1754944e-38, %v974
        %v976 = vsel %vm973, %v975, %v971
        %v977 = vmul.f32 %v931, %v976
        %v978 = vrcp.pop %v944
        %v979 = vmul.f32 %v944, %v978
        %v980 = vsub.f32 1.0, %v979
        %v981 = vmul.f32 %v978, %v980
        %v982 = vadd.f32 %v978, %v981
        %vm983 = vweird.f32 %v944
        %vm984 = vweird.f32 %v978
        %vm985 = vmor %vm983, %vm984
        %v986 = vsel %vm985, %v978, %v982
        %v987 = vand.u32 2147483647, %v944
        %vm988 = vcmp.eq.f32.partialorder %v987, 8.507059e+37
        %v989 = vand.u32 %v944, 2147483648
        %v990 = vor.u32 1.1754944e-38, %v989
        %v991 = vsel %vm988, %v990, %v986
        %v992 = vmul.f32 %v933, %v991
        %v993 = vrcp.pop %v947
        %v994 = vmul.f32 %v947, %v993
        %v995 = vsub.f32 1.0, %v994
        %v996 = vmul.f32 %v993, %v995
        %v997 = vadd.f32 %v993, %v996
        %vm998 = vweird.f32 %v947
        %vm999 = vweird.f32 %v993
        %vm1000 = vmor %vm998, %vm999
        %v1001 = vsel %vm1000, %v993, %v997
        %v1002 = vand.u32 2147483647, %v947
        %vm1003 = vcmp.eq.f32.partialorder %v1002, 8.507059e+37
        %v1004 = vand.u32 %v947, 2147483648
        %v1005 = vor.u32 1.1754944e-38, %v1004
        %v1006 = vsel %vm1003, %v1005, %v1001
        %v1007 = vmul.f32 %v935, %v1006
        %v1008 = vmul.f32 %v962, 0.9
        %v1009 = vmul.f32 %v977, 0.9
        %v1010 = vmul.f32 %v992, 0.9
        %v1011 = vmul.f32 %v1007, 0.9
        %v1012 = vld [vmem:[%s2] sm:$0xff]
        %v1013 = vld [vmem:[%s2 + $0x8] sm:$0xff]
        %v1014 = vld [vmem:[%s2 + $0x10] sm:$0xff]
        %v1015 = vld [vmem:[%s2 + $0x18] sm:$0x1]
        %v1016 = vmul.f32 %v1012, 0.1
        %v1017 = vmul.f32 %v1013, 0.1
        %v1018 = vmul.f32 %v1014, 0.1
        %v1019 = vmul.f32 %v1015, 0.1
        %v1020 = vadd.f32 %v1008, %v1016
        %v1021 = vadd.f32 %v1009, %v1017
        %v1022 = vadd.f32 %v1010, %v1018
        %v1023 = vadd.f32 %v1011, %v1019
        %v1024 = vsel %vm432, %v1020, -inf
        %1025 = vmax.xlane.f32.xlu0 %v1024
        %v1026 = vpop.xlane.xlu0 %1025
        %v1027 = vsel %vm432, %v1021, -inf
        %1028 = vmax.xlane.f32.xlu0 %v1027
        %v1029 = vpop.xlane.xlu0 %1028
        %v1030 = vsel %vm432, %v1022, -inf
        %1031 = vmax.xlane.f32.xlu0 %v1030
        %v1032 = vpop.xlane.xlu0 %1031
        %v1033 = vsel %vm436, %v1023, -inf
        %1034 = vmax.xlane.f32.xlu0 %v1033
        %v1035 = vpop.xlane.xlu0 %1034
        %v1036 = vadd.f32 %v1026, %v1029
        %v1037 = vadd.f32 %v1036, %v1032
        %v1038 = vsel %vm505, %v1035, 0.0
        %v1039 = vadd.f32 %v1037, %v1038
        %v1040 = vrot.slane %v1039, 4
        %v1041 = vadd.f32 %v1039, %v1040
        %v1042 = vrot.slane %v1041, 2
        %v1043 = vadd.f32 %v1041, %v1042
        %v1044 = vrot.slane %v1043, 1
        %v1045 = vadd.f32 %v1043, %v1044
        %v1046 = vrcp.pop 25.0
        %v1047 = vmul.f32 25.0, %v1046
        %v1048 = vsub.f32 1.0, %v1047
        %v1049 = vmul.f32 %v1046, %v1048
        %v1050 = vadd.f32 %v1046, %v1049
        %vm1051 = vweird.f32 %v1046
        %v1052 = vsel %vm1051, %v1046, %v1050
        %v1053 = vmul.f32 %v1045, %v1052
        %v1054 = vadd.f32 %v1053, 1e-05
        %v1055 = vlog2.pop %v1054
        %v1056 = vmul.f32 %v1055, 0.6931472
        %v1057 = vsub.f32 0.0, %v1056
        %1058 = vst.msk [vmem:[%s230] sm:$0x1] %vm523, %v1057
      $region40: #{tpu_custom_call.1} parent=31 // pred_fallthru
        _
      %p1059 = scmp.lt.s32.totalorder %s18, 1
      %s1060 = scalar_select %p1059, %s18, 1
      %s1061 = scalar_lea.vmem %s3, %s1060
      // Predicated region
      $region41: #{tpu_custom_call.1} parent=31 // pred_check
        %p1062 = pneg %p121
      $region42: #{tpu_custom_call.1} parent=31 // pred_check_branch
        %1064 = sbr.rel (%p1062) target = $region44
      $region43: #{tpu_custom_call.1} parent=31 // pred_region
        _
      $region44: #{tpu_custom_call.1} parent=31 // pred_fallthru
        _
    $region32: #{tpu_custom_call.1} parent=5 // pred_fallthru
      _
    %p1065 = scmp.le.s32.totalorder 2, %s9
    // Predicated region
    $region45: #{tpu_custom_call.1} parent=5 // pred_check
      %p1066 = pneg %p1065
    $region46: #{tpu_custom_call.1} parent=5 // pred_check_branch
      %1068 = sbr.rel (%p1066) target = $region48
    $region47: #{tpu_custom_call.1} parent=5 // pred_region
      %s1069 = ssub.s32 %s9, 2
      // Predicated region
      $region49: #{tpu_custom_call.1} parent=47 // pred_check
        %p1070 = pneg %p127
      $region50: #{tpu_custom_call.1} parent=47 // pred_check_branch
        %1072 = sbr.rel (%p1070) target = $region52
      $region51: #{tpu_custom_call.1} parent=47 // pred_region
        %p1073 = scmp.lt.s32.totalorder %s20, 1
        %s1074 = scalar_select %p1073, %s20, 1
        %s1075 = scalar_lea.vmem %s3, %s1074
      $region52: #{tpu_custom_call.1} parent=47 // pred_fallthru
        _
    $region48: #{tpu_custom_call.1} parent=5 // pred_fallthru
      _
  $region6: #{tpu_custom_call.1} parent=0 // loop_footer
    %s13 = sadd.s32 1, %s9
  $region7: #{tpu_custom_call.1} parent=0 // loop_footer_branch
    %8 = sbr.rel target = $region3
  $region8: #{tpu_custom_call.1} parent=0 // loop_exit
    _

</llo_original>
